<compile_context>
chip_gen: v5e
topology: v5e:2x2
jax: 0.10.0
libtpu: 0.0.40
codegen_flags: <defaults>
</compile_context>

<pallas_src>
import functools

import jax
import jax.numpy as jnp
from jax.experimental import pallas as pl
from jax.experimental.pallas import tpu as pltpu


def _round_up(x, mult):
    return ((x + mult - 1) // mult) * mult


def _cosface_pair_kernel(emb_r_ref, emb_c_ref, tgt_r_ref, tgt_c_ref,
                         row_id_ref, col_id_ref, col_bias_ref,
                         out_ref, l_p_ref, l_n_ref,
                         *, s, m, n_valid, n_pad):
    j = pl.program_id(1)          # column tile (streamed reduction axis)

    @pl.when(j == 0)
    def _init():
        l_p_ref[...] = jnp.zeros_like(l_p_ref[...])
        l_n_ref[...] = jnp.zeros_like(l_n_ref[...])

    # (tm, tn) cosine-similarity tile; contract the feature axis of BOTH
    # operands so no in-kernel transpose of the column tile is needed.
    dist = jax.lax.dot_general(
        emb_r_ref[...], emb_c_ref[...], (((1,), (1,)), ((), ())),
        preferred_element_type=jnp.float32)

    t = s * dist                                   # single scaled copy
    eq = tgt_r_ref[...] == tgt_c_ref[...]          # same-class mask (tm, tn)
    off_diag = row_id_ref[...] != col_id_ref[...]  # exclude i == j pairs
    pos = eq & off_diag

    # dist in [-1, 1] => static maxima.  col_bias is -s for valid columns
    # (shifts both exp arguments to <= ~0, with bf16 rounding slack) and a
    # large negative for padded columns (drops them from both running sums).
    # The s*m term of the negative branch is re-added at finalize time.
    arg = jnp.where(pos, -t, t) + col_bias_ref[...]
    e = jnp.exp(arg)
    l_p_ref[...] += jnp.sum(jnp.where(pos, e, 0.0), axis=1, keepdims=True)
    l_n_ref[...] += jnp.sum(jnp.where(eq, 0.0, e), axis=1, keepdims=True)

    @pl.when(j == pl.num_programs(1) - 1)
    def _finalize():
        # z = logsumexp_pos(-s*dist) + logsumexp_neg(s*dist + s*m)
        #   = log(l_p) + log(l_n) + s*(2 + m)
        # Rows with no positive pair: l_p == 0 -> log -> -inf -> softplus -> 0,
        # matching the reference's huge-negative-sentinel behaviour.
        z = jnp.log(l_p_ref[...]) + jnp.log(l_n_ref[...]) + (s * (2.0 + m))
        loss = jnp.maximum(z, 0.0) + jnp.log(1.0 + jnp.exp(-jnp.abs(z)))
        if n_valid < n_pad:                         # static branch
            loss = jnp.where(row_id_ref[...] < n_valid, loss, 0.0)
        out_ref[...] = loss


def _pick_tiles(n):
    """Return (tm, tn, n_pad).  Small N -> a single tile; large N -> 256-row
    tiles with the widest column tile (<=1024) whose padding waste is small."""
    n_pad = _round_up(n, 8)
    if n_pad <= 512:
        return n_pad, n_pad, n_pad
    tm = 256
    for tn in (1024, 512):
        np_ = _round_up(n, tn)                      # tn >= tm, both pow2
        if (np_ - n) <= max(n // 32, tn // 8):      # keep padding waste small
            return tm, tn, np_
    return tm, 256, _round_up(n, 256)


def cosface_pair_loss(embedding, targets, s=30.0, m=0.5, use_bf16_matmul=True):
    """embedding: (N, D) float, targets: (N,) int.  Returns scalar f32 loss."""
    N, D = embedding.shape
    emb = embedding.astype(jnp.float32)

    # F.normalize(p=2, dim=1): x / max(||x||_2, 1e-12), hoisted out of the
    # pairwise kernel (cheap O(N*D) XLA op).
    norm = jnp.sqrt(jnp.sum(emb * emb, axis=1, keepdims=True))
    emb_n = emb / jnp.maximum(norm, 1e-12)

    d_pad = _round_up(D, 128)                       # lane-dense feature dim
    tm, tn, n_pad = _pick_tiles(N)

    mm_dtype = jnp.bfloat16 if use_bf16_matmul else jnp.float32
    emb_p = jnp.zeros((n_pad, d_pad), mm_dtype).at[:N, :D].set(
        emb_n.astype(mm_dtype))

    tgt_p = jnp.full((n_pad,), -1, jnp.int32).at[:N].set(
        targets.astype(jnp.int32))
    ids = jax.lax.iota(jnp.int32, n_pad)
    # -s shift for valid columns; large negative for padded columns so they
    # vanish from both running sums (no extra in-kernel compare/AND).
    col_bias = jnp.where(ids < N, -float(s), -1.0e9).astype(jnp.float32)

    kernel = functools.partial(_cosface_pair_kernel, s=float(s), m=float(m),
                               n_valid=N, n_pad=n_pad)

    per_row = pl.pallas_call(
        kernel,
        out_shape=jax.ShapeDtypeStruct((n_pad, 1), jnp.float32),
        grid_spec=pltpu.PrefetchScalarGridSpec(
            num_scalar_prefetch=0,
            grid=(n_pad // tm, n_pad // tn),
            in_specs=[
                pl.BlockSpec((tm, d_pad), lambda i, j: (i, 0)),   # row emb tile
                pl.BlockSpec((tn, d_pad), lambda i, j: (j, 0)),   # col emb tile
                pl.BlockSpec((tm, 1), lambda i, j: (i, 0)),       # row targets
                pl.BlockSpec((1, tn), lambda i, j: (0, j)),       # col targets
                pl.BlockSpec((tm, 1), lambda i, j: (i, 0)),       # row ids
                pl.BlockSpec((1, tn), lambda i, j: (0, j)),       # col ids
                pl.BlockSpec((1, tn), lambda i, j: (0, j)),       # col bias
            ],
            out_specs=pl.BlockSpec((tm, 1), lambda i, j: (i, 0)),
            scratch_shapes=[pltpu.VMEM((tm, 1), jnp.float32),     # sum_p
                            pltpu.VMEM((tm, 1), jnp.float32)],    # sum_n
        ),
        compiler_params=pltpu.CompilerParams(
            dimension_semantics=("parallel", "arbitrary"),
            vmem_limit_bytes=32 * 1024 * 1024,
        ),
    )(emb_p, emb_p,
      tgt_p.reshape(n_pad, 1), tgt_p.reshape(1, n_pad),
      ids.reshape(n_pad, 1), ids.reshape(1, n_pad),
      col_bias.reshape(1, n_pad))

    # Padded rows are zeroed in-kernel; O(N) mean outside the kernel.
    return jnp.sum(per_row) / jnp.float32(N)


def _reference_loss(embedding, targets, s=30.0, m=0.5):
    """Pure-JAX transcription of the PyTorch module (sanity check)."""
    emb = embedding.astype(jnp.float32)
    norm = jnp.sqrt(jnp.sum(emb * emb, axis=1, keepdims=True))
    emb_n = emb / jnp.maximum(norm, 1e-12)
    dist = emb_n @ emb_n.T
    n = dist.shape[0]
    eq = (targets[:, None] == targets[None, :]).astype(jnp.float32)
    is_pos = eq - jnp.eye(n, dtype=jnp.float32)
    is_neg = 1.0 - eq
    logit_p = -s * (dist * is_pos) + (-99999999.0) * (1.0 - is_pos)
    logit_n = s * (dist * is_neg + m) + (-99999999.0) * (1.0 - is_neg)
    lse_p = jax.scipy.special.logsumexp(logit_p, axis=1)
    lse_n = jax.scipy.special.logsumexp(logit_n, axis=1)
    return jnp.mean(jax.nn.softplus(lse_p + lse_n))


if __name__ == "__main__":
    key = jax.random.PRNGKey(0)
    k_emb, k_tgt = jax.random.split(key)
    N, D = 8, 32
    embedding = jax.random.normal(k_emb, (N, D), dtype=jnp.float32)
    targets = jax.random.randint(k_tgt, (N,), 0, 3, dtype=jnp.int32)

    ref = _reference_loss(embedding, targets)

    # f32 matmul path: tight tolerance against the reference.
    loss_f32 = jax.jit(
        functools.partial(cosface_pair_loss, use_bf16_matmul=False))(
            embedding, targets)
    jax.block_until_ready(loss_f32)
    assert bool(jnp.isfinite(loss_f32)), "f32 loss is not finite"
    assert abs(float(loss_f32) - float(ref)) <= 1e-3 + 1e-3 * abs(float(ref)), (
        float(loss_f32), float(ref))

    # bf16 matmul path (default, faster): looser tolerance — bf16 rounding of
    # the cosine similarities is amplified by s=30 inside the exponent.
    loss_bf16 = jax.jit(cosface_pair_loss)(embedding, targets)
    jax.block_until_ready(loss_bf16)
    assert bool(jnp.isfinite(loss_bf16)), "bf16 loss is not finite"
    assert abs(float(loss_bf16) - float(ref)) <= 5e-2 + 5e-2 * abs(float(ref)), (
        float(loss_bf16), float(ref))

    print("KERNEL_OK")
</pallas_src>

<mosaic_0001>
module attributes {stable_mosaic.version = 11 : i64} {
  func.func @_cosface_pair_kernel(%arg0: i32, %arg1: i32, %arg2: memref<8x128xf32, #tpu.memory_space<vmem>>, %arg3: memref<8x128xf32, #tpu.memory_space<vmem>>, %arg4: memref<8x1xi32, #tpu.memory_space<vmem>>, %arg5: memref<1x8xi32, #tpu.memory_space<vmem>>, %arg6: memref<8x1xi32, #tpu.memory_space<vmem>>, %arg7: memref<1x8xi32, #tpu.memory_space<vmem>>, %arg8: memref<1x8xf32, #tpu.memory_space<vmem>>, %arg9: memref<8x1xf32, #tpu.memory_space<vmem>>, %arg10: memref<8x1xf32, #tpu.memory_space<vmem>>, %arg11: memref<8x1xf32, #tpu.memory_space<vmem>>) attributes {dimension_semantics = [#tpu.dimension_semantics<parallel>, #tpu.dimension_semantics<arbitrary>], iteration_bounds = array<i64: 1, 1>, scalar_prefetch = 0 : i64, scratch_operands = 2 : i64, tpu.core_type = #tpu.core_type<tc>, window_params = [{transform_indices = @transform_0, window_bounds = array<i64: 8, 128>}, {transform_indices = @transform_1, window_bounds = array<i64: 8, 128>}, {transform_indices = @transform_2, window_bounds = array<i64: 8, 1>}, {transform_indices = @transform_3, window_bounds = array<i64: 1, 8>}, {transform_indices = @transform_4, window_bounds = array<i64: 8, 1>}, {transform_indices = @transform_5, window_bounds = array<i64: 1, 8>}, {transform_indices = @transform_6, window_bounds = array<i64: 1, 8>}, {transform_indices = @transform_7, window_bounds = array<i64: 8, 1>}]} {
    %c0_i32 = arith.constant 0 : i32
    %0 = arith.cmpi eq, %arg1, %c0_i32 : i32
    %1 = arith.extui %0 : i1 to i32
    %c0_i32_0 = arith.constant 0 : i32
    %2 = arith.cmpi ne, %1, %c0_i32_0 : i32
    scf.if %2 {
      %cst_30 = arith.constant 0.000000e+00 : f32
      %43 = vector.broadcast %cst_30 : f32 to vector<8x1xf32>
      %c0_31 = arith.constant 0 : index
      %c0_32 = arith.constant 0 : index
      %44 = vector.load %arg10[%c0_31, %c0_32] : memref<8x1xf32, #tpu.memory_space<vmem>>, vector<8x1xf32>
      tpu.vector_store %arg10[%c0_31, %c0_32], %43 {strides = array<i32>} : memref<8x1xf32, #tpu.memory_space<vmem>>, vector<8x1xf32>,
      %cst_33 = arith.constant 0.000000e+00 : f32
      %45 = vector.broadcast %cst_33 : f32 to vector<8x1xf32>
      %c0_34 = arith.constant 0 : index
      %c0_35 = arith.constant 0 : index
      %46 = vector.load %arg11[%c0_34, %c0_35] : memref<8x1xf32, #tpu.memory_space<vmem>>, vector<8x1xf32>
      tpu.vector_store %arg11[%c0_34, %c0_35], %45 {strides = array<i32>} : memref<8x1xf32, #tpu.memory_space<vmem>>, vector<8x1xf32>,
    } else {
    }
    %c0 = arith.constant 0 : index
    %c0_1 = arith.constant 0 : index
    %3 = vector.load %arg2[%c0, %c0_1] : memref<8x128xf32, #tpu.memory_space<vmem>>, vector<8x128xf32>
    %c0_2 = arith.constant 0 : index
    %c0_3 = arith.constant 0 : index
    %4 = vector.load %arg3[%c0_2, %c0_3] : memref<8x128xf32, #tpu.memory_space<vmem>>, vector<8x128xf32>
    %cst = arith.constant dense<0.000000e+00> : vector<8x8xf32>
    %5 = tpu.matmul %3, %4, %cst {dimension_numbers = #tpu.dot_dimension_numbers<[1], [1], [0], [0], [0, 0, 1, 0], [], []>} : vector<8x128xf32>, vector<8x128xf32>, vector<8x8xf32> -> vector<8x8xf32>
    %cst_4 = arith.constant 3.000000e+01 : f32
    %6 = vector.broadcast %cst_4 : f32 to vector<8x8xf32>
    %7 = arith.mulf %6, %5 : vector<8x8xf32>
    %c0_5 = arith.constant 0 : index
    %c0_6 = arith.constant 0 : index
    %8 = vector.load %arg4[%c0_5, %c0_6] : memref<8x1xi32, #tpu.memory_space<vmem>>, vector<8x1xi32>
    %c0_7 = arith.constant 0 : index
    %c0_8 = arith.constant 0 : index
    %9 = vector.load %arg5[%c0_7, %c0_8] : memref<1x8xi32, #tpu.memory_space<vmem>>, vector<1x8xi32>
    %10 = vector.broadcast %8 : vector<8x1xi32> to vector<8x8xi32>
    %11 = vector.broadcast %9 : vector<1x8xi32> to vector<8x8xi32>
    %12 = arith.cmpi eq, %10, %11 : vector<8x8xi32>
    %c0_9 = arith.constant 0 : index
    %c0_10 = arith.constant 0 : index
    %13 = vector.load %arg6[%c0_9, %c0_10] : memref<8x1xi32, #tpu.memory_space<vmem>>, vector<8x1xi32>
    %c0_11 = arith.constant 0 : index
    %c0_12 = arith.constant 0 : index
    %14 = vector.load %arg7[%c0_11, %c0_12] : memref<1x8xi32, #tpu.memory_space<vmem>>, vector<1x8xi32>
    %15 = vector.broadcast %13 : vector<8x1xi32> to vector<8x8xi32>
    %16 = vector.broadcast %14 : vector<1x8xi32> to vector<8x8xi32>
    %17 = arith.cmpi ne, %15, %16 : vector<8x8xi32>
    %18 = arith.andi %12, %17 : vector<8x8xi1>
    %cst_13 = arith.constant 0.000000e+00 : f32
    %19 = vector.broadcast %cst_13 : f32 to vector<8x8xf32>
    %20 = arith.subf %19, %7 : vector<8x8xf32>
    %21 = arith.select %18, %20, %7 : vector<8x8xi1>, vector<8x8xf32>
    %c0_14 = arith.constant 0 : index
    %c0_15 = arith.constant 0 : index
    %22 = vector.load %arg8[%c0_14, %c0_15] : memref<1x8xf32, #tpu.memory_space<vmem>>, vector<1x8xf32>
    %23 = vector.broadcast %22 : vector<1x8xf32> to vector<8x8xf32>
    %24 = arith.addf %21, %23 : vector<8x8xf32>
    %25 = math.exp %24 : vector<8x8xf32>
    %c0_16 = arith.constant 0 : index
    %c0_17 = arith.constant 0 : index
    %26 = vector.load %arg10[%c0_16, %c0_17] : memref<8x1xf32, #tpu.memory_space<vmem>>, vector<8x1xf32>
    %cst_18 = arith.constant 0.000000e+00 : f32
    %27 = vector.broadcast %cst_18 : f32 to vector<8x8xf32>
    %28 = arith.select %18, %25, %27 : vector<8x8xi1>, vector<8x8xf32>
    %cst_19 = arith.constant dense<0.000000e+00> : vector<8xf32>
    %29 = vector.multi_reduction <add>, %28, %cst_19 [1] : vector<8x8xf32> to vector<8xf32>
    %30 = vector.shape_cast %29 : vector<8xf32> to vector<8x1xf32>
    %31 = arith.addf %26, %30 : vector<8x1xf32>
    %c0_20 = arith.constant 0 : index
    %c0_21 = arith.constant 0 : index
    %32 = vector.load %arg10[%c0_20, %c0_21] : memref<8x1xf32, #tpu.memory_space<vmem>>, vector<8x1xf32>
    tpu.vector_store %arg10[%c0_20, %c0_21], %31 {strides = array<i32>} : memref<8x1xf32, #tpu.memory_space<vmem>>, vector<8x1xf32>,
    %c0_22 = arith.constant 0 : index
    %c0_23 = arith.constant 0 : index
    %33 = vector.load %arg11[%c0_22, %c0_23] : memref<8x1xf32, #tpu.memory_space<vmem>>, vector<8x1xf32>
    %cst_24 = arith.constant 0.000000e+00 : f32
    %34 = vector.broadcast %cst_24 : f32 to vector<8x8xf32>
    %35 = arith.select %12, %34, %25 : vector<8x8xi1>, vector<8x8xf32>
    %cst_25 = arith.constant dense<0.000000e+00> : vector<8xf32>
    %36 = vector.multi_reduction <add>, %35, %cst_25 [1] : vector<8x8xf32> to vector<8xf32>
    %37 = vector.shape_cast %36 : vector<8xf32> to vector<8x1xf32>
    %38 = arith.addf %33, %37 : vector<8x1xf32>
    %c0_26 = arith.constant 0 : index
    %c0_27 = arith.constant 0 : index
    %39 = vector.load %arg11[%c0_26, %c0_27] : memref<8x1xf32, #tpu.memory_space<vmem>>, vector<8x1xf32>
    tpu.vector_store %arg11[%c0_26, %c0_27], %38 {strides = array<i32>} : memref<8x1xf32, #tpu.memory_space<vmem>>, vector<8x1xf32>,
    %c0_i32_28 = arith.constant 0 : i32
    %40 = arith.cmpi eq, %arg1, %c0_i32_28 : i32
    %41 = arith.extui %40 : i1 to i32
    %c0_i32_29 = arith.constant 0 : i32
    %42 = arith.cmpi ne, %41, %c0_i32_29 : i32
    scf.if %42 {
      %c0_30 = arith.constant 0 : index
      %c0_31 = arith.constant 0 : index
      %43 = vector.load %arg10[%c0_30, %c0_31] : memref<8x1xf32, #tpu.memory_space<vmem>>, vector<8x1xf32>
      %44 = math.log %43 : vector<8x1xf32>
      %c0_32 = arith.constant 0 : index
      %c0_33 = arith.constant 0 : index
      %45 = vector.load %arg11[%c0_32, %c0_33] : memref<8x1xf32, #tpu.memory_space<vmem>>, vector<8x1xf32>
      %46 = math.log %45 : vector<8x1xf32>
      %47 = arith.addf %44, %46 : vector<8x1xf32>
      %cst_34 = arith.constant 7.500000e+01 : f32
      %48 = vector.broadcast %cst_34 : f32 to vector<8x1xf32>
      %49 = arith.addf %47, %48 : vector<8x1xf32>
      %cst_35 = arith.constant 0.000000e+00 : f32
      %50 = vector.broadcast %cst_35 : f32 to vector<8x1xf32>
      %51 = arith.maximumf %49, %50 : vector<8x1xf32>
      %52 = math.absf %49 : vector<8x1xf32>
      %cst_36 = arith.constant 0.000000e+00 : f32
      %53 = vector.broadcast %cst_36 : f32 to vector<8x1xf32>
      %54 = arith.subf %53, %52 : vector<8x1xf32>
      %55 = math.exp %54 : vector<8x1xf32>
      %cst_37 = arith.constant 1.000000e+00 : f32
      %56 = vector.broadcast %cst_37 : f32 to vector<8x1xf32>
      %57 = arith.addf %56, %55 : vector<8x1xf32>
      %58 = math.log %57 : vector<8x1xf32>
      %59 = arith.addf %51, %58 : vector<8x1xf32>
      %c0_38 = arith.constant 0 : index
      %c0_39 = arith.constant 0 : index
      %60 = vector.load %arg9[%c0_38, %c0_39] : memref<8x1xf32, #tpu.memory_space<vmem>>, vector<8x1xf32>
      tpu.vector_store %arg9[%c0_38, %c0_39], %59 {strides = array<i32>} : memref<8x1xf32, #tpu.memory_space<vmem>>, vector<8x1xf32>,
    } else {
    }
    return
  }
  func.func @transform_0(%arg0: i32, %arg1: i32) -> (i32, i32) {
    %c0_i32 = arith.constant 0 : i32
    %c0_i32_0 = arith.constant 0 : i32
    return %arg0, %c0_i32 : i32, i32
  }
  func.func @transform_1(%arg0: i32, %arg1: i32) -> (i32, i32) {
    %c0_i32 = arith.constant 0 : i32
    %c0_i32_0 = arith.constant 0 : i32
    return %arg1, %c0_i32 : i32, i32
  }
  func.func @transform_2(%arg0: i32, %arg1: i32) -> (i32, i32) {
    %c0_i32 = arith.constant 0 : i32
    %c0_i32_0 = arith.constant 0 : i32
    return %arg0, %c0_i32 : i32, i32
  }
  func.func @transform_3(%arg0: i32, %arg1: i32) -> (i32, i32) {
    %c0_i32 = arith.constant 0 : i32
    %c0_i32_0 = arith.constant 0 : i32
    return %c0_i32, %arg1 : i32, i32
  }
  func.func @transform_4(%arg0: i32, %arg1: i32) -> (i32, i32) {
    %c0_i32 = arith.constant 0 : i32
    %c0_i32_0 = arith.constant 0 : i32
    return %arg0, %c0_i32 : i32, i32
  }
  func.func @transform_5(%arg0: i32, %arg1: i32) -> (i32, i32) {
    %c0_i32 = arith.constant 0 : i32
    %c0_i32_0 = arith.constant 0 : i32
    return %c0_i32, %arg1 : i32, i32
  }
  func.func @transform_6(%arg0: i32, %arg1: i32) -> (i32, i32) {
    %c0_i32 = arith.constant 0 : i32
    %c0_i32_0 = arith.constant 0 : i32
    return %c0_i32, %arg1 : i32, i32
  }
  func.func @transform_7(%arg0: i32, %arg1: i32) -> (i32, i32) {
    %c0_i32 = arith.constant 0 : i32
    %c0_i32_0 = arith.constant 0 : i32
    return %arg0, %c0_i32 : i32, i32
  }
}

</mosaic_0001>

<llo_original>
// kernel: cosface_pair_loss.1
$region0: #{cosface_pair_loss.1}
  #allocation0 [shape = 'u32[]', space=smem, size = 0x4, offset = 0x4, fixed_abs, tag = 'smem constant byte address 0x4 - core index']
  #allocation1 [shape = 'u32[72,128]{1,0:T(1,128)}', space=vmem, size = 0x9000, scoped, tag = 'internal scratch']
  #allocation2 [shape = 'f32[8,1]{1,0:T(8,128)}', space=vmem, size = 0x1000, scoped, tag = 'scratch operand']
  #allocation3 [shape = 'f32[8,1]{1,0:T(8,128)}', space=vmem, size = 0x1000, scoped, tag = 'scratch operand']
  %s0 = inlined_call_operand.vmem [shape: f32[8,128], index: 0, kind: input, shape index: {}, may-alias: {0,1}]
  %s1 = inlined_call_operand.vmem [shape: f32[8,128], index: 1, kind: input, shape index: {}, may-alias: {0,1}]
  %s2 = inlined_call_operand.vmem [shape: s32[8,1], index: 2, kind: input, shape index: {}]
  %s3 = inlined_call_operand.vmem [shape: s32[1,8], index: 3, kind: input, shape index: {}]
  %s4 = inlined_call_operand.vmem [shape: s32[8,1], index: 4, kind: input, shape index: {}]
  %s5 = inlined_call_operand.vmem [shape: s32[1,8], index: 5, kind: input, shape index: {}]
  %s6 = inlined_call_operand.vmem [shape: f32[1,8], index: 6, kind: input, shape index: {}]
  %s7 = inlined_call_operand.vmem [shape: f32[8,1], index: 7, kind: output, shape index: {}]
  %s8 = sld [smem:[#allocation0]]
  $region46: #{cosface_pair_loss.1} parent=0
    _
  %s10 = ssub.s32 1, %s8
  %s11 = scalar_select 0, %s10, %s8
  // Predicated region
  $region2: #{cosface_pair_loss.1} parent=0 // pred_check
    _
  $region3: #{cosface_pair_loss.1} parent=0 // pred_check_branch
    %13 = sbr.rel (0) target = $region5
  $region4: #{cosface_pair_loss.1} parent=0 // pred_region
    _
  $region5: #{cosface_pair_loss.1} parent=0 // pred_fallthru
    _
  // Predicated region
  $region6: #{cosface_pair_loss.1} parent=0 // pred_check
    _
  $region7: #{cosface_pair_loss.1} parent=0 // pred_check_branch
    %15 = sbr.rel (0) target = $region9
  $region8: #{cosface_pair_loss.1} parent=0 // pred_region
    _
  $region9: #{cosface_pair_loss.1} parent=0 // pred_fallthru
    _
  // Predicated region
  $region10: #{cosface_pair_loss.1} parent=0 // pred_check
    _
  $region11: #{cosface_pair_loss.1} parent=0 // pred_check_branch
    %17 = sbr.rel (0) target = $region13
  $region12: #{cosface_pair_loss.1} parent=0 // pred_region
    _
  $region13: #{cosface_pair_loss.1} parent=0 // pred_fallthru
    _
  // Predicated region
  $region14: #{cosface_pair_loss.1} parent=0 // pred_check
    _
  $region15: #{cosface_pair_loss.1} parent=0 // pred_check_branch
    %19 = sbr.rel (0) target = $region17
  $region16: #{cosface_pair_loss.1} parent=0 // pred_region
    _
  $region17: #{cosface_pair_loss.1} parent=0 // pred_fallthru
    _
  // Predicated region
  $region18: #{cosface_pair_loss.1} parent=0 // pred_check
    _
  $region19: #{cosface_pair_loss.1} parent=0 // pred_check_branch
    %21 = sbr.rel (0) target = $region21
  $region20: #{cosface_pair_loss.1} parent=0 // pred_region
    _
  $region21: #{cosface_pair_loss.1} parent=0 // pred_fallthru
    _
  // Predicated region
  $region22: #{cosface_pair_loss.1} parent=0 // pred_check
    _
  $region23: #{cosface_pair_loss.1} parent=0 // pred_check_branch
    %23 = sbr.rel (0) target = $region25
  $region24: #{cosface_pair_loss.1} parent=0 // pred_region
    _
  $region25: #{cosface_pair_loss.1} parent=0 // pred_fallthru
    _
  // Predicated region
  $region26: #{cosface_pair_loss.1} parent=0 // pred_check
    _
  $region27: #{cosface_pair_loss.1} parent=0 // pred_check_branch
    %25 = sbr.rel (0) target = $region29
  $region28: #{cosface_pair_loss.1} parent=0 // pred_region
    _
  $region29: #{cosface_pair_loss.1} parent=0 // pred_fallthru
    _
  %p26 = scmp.eq.s32.totalorder 0, 0
  // Predicated region
  $region30: #{cosface_pair_loss.1} parent=0 // pred_check
    %p27 = pneg %p26
  $region31: #{cosface_pair_loss.1} parent=0 // pred_check_branch
    %29 = sbr.rel (%p27) target = $region33
  $region32: #{cosface_pair_loss.1} parent=0 // pred_region
    %vm30 = vcmask 7168
    %31 = vst.msk [vmem:[#allocation2] sm:$0xff] %vm30, 0.0
    %32 = vst.msk [vmem:[#allocation3] sm:$0xff] %vm30, 0.0
  $region33: #{cosface_pair_loss.1} parent=0 // pred_fallthru
    _
  %v33 = vld [vmem:[%s0] sm:$0xff]
  %v34 = vld [vmem:[%s1] sm:$0xff]
  %35 = vmatpush.xpose.msra.mxu0 0.0
  %36 = vmatpush.xpose.msra.mxu0 0.0
  %37 = vmatpush.xpose.msra.mxu0 0.0
  %38 = vmatpush.xpose.msra.mxu0 0.0
  %39 = vmatpush.xpose.msra.mxu0 0.0
  %40 = vmatpush.xpose.msra.mxu0 0.0
  %41 = vmatpush.xpose.msra.mxu0 0.0
  %42 = vmatpush.xpose.msra.mxu0 0.0
  %43 = vmatpush.xpose.msra.mxu0 0.0
  %44 = vmatpush.xpose.msra.mxu0 0.0
  %45 = vmatpush.xpose.msra.mxu0 0.0
  %46 = vmatpush.xpose.msra.mxu0 0.0
  %47 = vmatpush.xpose.msra.mxu0 0.0
  %48 = vmatpush.xpose.msra.mxu0 0.0
  %49 = vmatpush.xpose.msra.mxu0 0.0
  %50 = vmatpush.xpose.msra.mxu0 %v34
  %51 = vmatmul.f32.gmra.mxu0 %v33
  %v52 = vpop.f32.mrf.mxu0
  %v53 = vadd.f32 0.0, %v52
  %54 = vdwg.mxu0
  %v55 = vmul.f32 %v53, 30.0
  %v56 = vld [vmem:[%s2] sm:$0xff]
  %v57 = vld [vmem:[%s3] sm:$0x1]
  %58 = vset.pattern.permute.xlu0 0
  %59 = vperm.xlu0 %58, %v56
  %v60 = vpop.permute.xlu0 %59
  %v61 = vperm.slane %v57, 0
  %vm62 = vcmp.eq.s32.totalorder %v60, %v61
  %v63 = vld [vmem:[%s4] sm:$0xff]
  %v64 = vld [vmem:[%s5] sm:$0x1]
  %65 = vset.pattern.permute.xlu0 0
  %66 = vperm.xlu0 %65, %v63
  %v67 = vpop.permute.xlu0 %66
  %v68 = vperm.slane %v64, 0
  %vm69 = vcmp.ne.s32.totalorder %v67, %v68
  %vm70 = vmand %vm62, %vm69
  %v71 = vsub.f32 0.0, %v55
  %v72 = vsel %vm70, %v71, %v55
  %v73 = vld [vmem:[%s6] sm:$0x1]
  %v75 = vperm.slane %v73, 0
  %v77 = vadd.f32 %v72, %v75
  %v78 = vmul.f32 %v77, 1.442695
  %v79 = vpow.pop %v78
  %v80 = vld [vmem:[#allocation2] sm:$0xff]
  %v81 = vsel %vm70, %v79, 0.0
  %vm82 = vcmask 64512
  %v83 = vsel %vm82, %v81, 0.0
  %84 = vadd.xlane.f32.xlu0 %v83
  %v85 = vpop.xlane.xlu0 %84
  %v86 = vadd.f32 %v80, %v85
  %vm87 = vcmask 7168
  %88 = vst.msk [vmem:[#allocation2] sm:$0xff] %vm87, %v86
  %v89 = vld [vmem:[#allocation3] sm:$0xff]
  %v90 = vsel %vm62, 0.0, %v79
  %v91 = vsel %vm82, %v90, 0.0
  %92 = vadd.xlane.f32.xlu0 %v91
  %v93 = vpop.xlane.xlu0 %92
  %v94 = vadd.f32 %v89, %v93
  %95 = vst.msk [vmem:[#allocation3] sm:$0xff] %vm87, %v94
  // Predicated region
  $region34: #{cosface_pair_loss.1} parent=0 // pred_check
    %p96 = pneg %p26
  $region35: #{cosface_pair_loss.1} parent=0 // pred_check_branch
    %98 = sbr.rel (%p96) target = $region37
  $region36: #{cosface_pair_loss.1} parent=0 // pred_region
    %v99 = vld [vmem:[#allocation2] sm:$0xff]
    %v100 = vlog2.pop %v99
    %v101 = vmul.f32 %v100, 0.6931472
    %v102 = vld [vmem:[#allocation3] sm:$0xff]
    %v103 = vlog2.pop %v102
    %v104 = vmul.f32 %v103, 0.6931472
    %v105 = vadd.f32 %v101, %v104
    %v106 = vadd.f32 %v105, 75.0
    %v107 = vmax.f32 %v106, 0.0
    %v108 = vand.u32 2147483647, %v106
    %v109 = vsub.f32 0.0, %v108
    %v110 = vmul.f32 %v109, 1.442695
    %v111 = vpow.pop %v110
    %v112 = vadd.f32 %v111, 1.0
    %v113 = vlog2.pop %v112
    %v114 = vmul.f32 %v113, 0.6931472
    %v115 = vadd.f32 %v107, %v114
    %116 = vst.msk [vmem:[%s7] sm:$0xff] %vm87, %v115
  $region37: #{cosface_pair_loss.1} parent=0 // pred_fallthru
    _
  // Predicated region
  $region38: #{cosface_pair_loss.1} parent=0 // pred_check
    _
  $region39: #{cosface_pair_loss.1} parent=0 // pred_check_branch
    %118 = sbr.rel (0) target = $region41
  $region40: #{cosface_pair_loss.1} parent=0 // pred_region
    _
  $region41: #{cosface_pair_loss.1} parent=0 // pred_fallthru
    _
  // Predicated region
  $region42: #{cosface_pair_loss.1} parent=0 // pred_check
    _
  $region43: #{cosface_pair_loss.1} parent=0 // pred_check_branch
    %120 = sbr.rel (0) target = $region45
  $region44: #{cosface_pair_loss.1} parent=0 // pred_region
    _
  $region45: #{cosface_pair_loss.1} parent=0 // pred_fallthru
    _

</llo_original>
